<compile_context>
chip_gen: v6e
topology: v6e:2x2x1
jax: 0.10.0
libtpu: 0.0.40
codegen_flags: <defaults>
</compile_context>

<pallas_src>
import jax
import jax.numpy as jnp
from jax.experimental import pallas as pl
from jax.experimental.pallas import tpu as pltpu

_LANES = 128
_SUBLANES = 8
_LOG_CLAMP = -100.0


def _make_kernel(rows, tile_rows, lanes, inner_blocks):
    """rows/tile_rows/lanes/inner_blocks are static Python ints (closure)."""

    def kernel(x_ref, t_ref, m_ref, loss_ref, msum_ref, loss_acc, mask_acc):
        p = pl.program_id(0)          # parallel partition (megacore)
        i = pl.program_id(1)          # reduction axis (arbitrary)

        @pl.when(i == 0)
        def _init():
            loss_acc[...] = jnp.zeros_like(loss_acc)
            mask_acc[...] = jnp.zeros_like(mask_acc)

        x = x_ref[...].astype(jnp.float32)
        t = t_ref[...].astype(jnp.float32)
        m = m_ref[...].astype(jnp.float32)

        # Row-validity mask: handles (a) the partial last block when rows is not a
        # multiple of tile_rows, and (b) fully out-of-range blocks when the number of
        # blocks does not divide evenly across partitions (their index_map is clamped,
        # so they reload valid data which we zero out here).
        block_idx = p * inner_blocks + i
        row_start = block_idx * tile_rows
        row_ids = jax.lax.broadcasted_iota(jnp.int32, (tile_rows, lanes), 0) + row_start
        valid = row_ids < rows

        pm = x * m
        tm = t * m
        # clamp-before-multiply keeps 0*log(0) contributions at exactly 0 (matches torch)
        log_p = jnp.maximum(jnp.log(pm), _LOG_CLAMP)
        log_1mp = jnp.maximum(jnp.log(1.0 - pm), _LOG_CLAMP)
        loss = -(tm * log_p + (1.0 - tm) * log_1mp)

        # Pure VPU elementwise accumulation (no per-step cross-lane reduce).
        loss_acc[...] += jnp.where(valid, loss, 0.0)
        mask_acc[...] += jnp.where(valid, m, 0.0)

        # Single cross-lane reduction per partition, broadcast into a lane-dense
        # (8,128) output block so the store is a plain unmasked vst.
        @pl.when(i == pl.num_programs(1) - 1)
        def _finalize():
            loss_ref[...] = jnp.full(loss_ref.shape, jnp.sum(loss_acc[...]), jnp.float32)
            msum_ref[...] = jnp.full(msum_ref.shape, jnp.sum(mask_acc[...]), jnp.float32)

    return kernel


def bce_masked_loss(inp, target, mask, *, tile_rows=1024, num_partitions=2):
    """inp/target/mask: identical shapes (e.g. NCHW). Returns scalar f32 loss.

    Inputs are consumed in their native dtype (upcast to f32 inside the kernel), so
    callers may pass 0/1-valued target/mask as bf16/int8 to halve HBM traffic.
    """
    assert inp.shape == target.shape == mask.shape
    n = inp.size
    lanes = _LANES
    # Only pad when the flat size is not already a multiple of 8*128 (typical NCHW
    # with H*W a multiple of 128 needs no pad). Zero padding contributes exactly 0
    # to both the loss sum and the mask sum.
    pad = (-n) % (_SUBLANES * lanes)

    def _prep(a):
        a = a.reshape(-1)
        if pad:
            a = jnp.pad(a, (0, pad))
        return a.reshape(-1, lanes)

    x2, t2, m2 = _prep(inp), _prep(target), _prep(mask)
    rows = x2.shape[0]                          # multiple of 8
    tr = min(tile_rows, rows)                   # multiple of 8, <= rows
    total_blocks = pl.cdiv(rows, tr)
    num_p = max(1, min(num_partitions, total_blocks))
    inner_blocks = pl.cdiv(total_blocks, num_p)

    def in_map(p, i):
        # clamp so a trailing out-of-range block (when total_blocks % num_p != 0)
        # re-reads the last valid block; its contribution is masked out in-kernel.
        return (jnp.minimum(p * inner_blocks + i, total_blocks - 1), 0)

    in_spec = pl.BlockSpec((tr, lanes), in_map)
    out_spec = pl.BlockSpec((_SUBLANES, lanes), lambda p, i: (p, 0))

    kernel = _make_kernel(rows, tr, lanes, inner_blocks)

    loss_part, mask_part = pl.pallas_call(
        kernel,
        out_shape=(
            jax.ShapeDtypeStruct((num_p * _SUBLANES, lanes), jnp.float32),
            jax.ShapeDtypeStruct((num_p * _SUBLANES, lanes), jnp.float32),
        ),
        grid_spec=pltpu.PrefetchScalarGridSpec(
            num_scalar_prefetch=0,
            grid=(num_p, inner_blocks),
            in_specs=[in_spec, in_spec, in_spec],
            out_specs=[out_spec, out_spec],
            scratch_shapes=[
                pltpu.VMEM((tr, lanes), jnp.float32),   # loss accumulator
                pltpu.VMEM((tr, lanes), jnp.float32),   # mask accumulator
            ],
        ),
        compiler_params=pltpu.CompilerParams(
            dimension_semantics=("parallel", "arbitrary"),
        ),
    )(x2, t2, m2)

    total_loss = jnp.sum(loss_part[::_SUBLANES, 0])
    total_mask = jnp.sum(mask_part[::_SUBLANES, 0])
    # NOTE: division by zero (mask.sum()==0) yields NaN/Inf, matching the reference.
    return total_loss / total_mask


def _reference(inp, target, mask):
    p = inp * mask
    t = target * mask
    log_p = jnp.maximum(jnp.log(p), _LOG_CLAMP)
    log_1mp = jnp.maximum(jnp.log(1.0 - p), _LOG_CLAMP)
    loss = -(t * log_p + (1.0 - t) * log_1mp)
    return jnp.sum(loss) / jnp.sum(mask)


def _make_inputs(key, shape):
    k1, k2, k3 = jax.random.split(key, 3)
    inp = jax.random.uniform(k1, shape, jnp.float32, 1e-4, 1.0 - 1e-4)
    target = (jax.random.uniform(k2, shape) > 0.5).astype(jnp.float32)
    mask = (jax.random.uniform(k3, shape) > 0.3).astype(jnp.float32)
    return inp, target, mask


if __name__ == "__main__":
    key = jax.random.PRNGKey(0)
    k_a, k_b, k_c = jax.random.split(key, 3)

    # 1) Spec shape (NCHW, like the PyTorch module): single block, single partition.
    inp, target, mask = _make_inputs(k_a, (2, 4, 16, 16))
    out = jax.block_until_ready(bce_masked_loss(inp, target, mask))
    ref = _reference(inp, target, mask)
    assert jnp.allclose(out, ref, rtol=1e-5, atol=1e-5), (out, ref)

    # 2) Larger shape: exercises the 2-way parallel partition path.
    inp, target, mask = _make_inputs(k_b, (2, 8, 128, 128))
    out = jax.block_until_ready(bce_masked_loss(inp, target, mask))
    ref = _reference(inp, target, mask)
    assert jnp.allclose(out, ref, rtol=1e-4, atol=1e-5), (out, ref)

    # 3) Uneven shape with a forced small tile: exercises the partial-block row mask.
    inp, target, mask = _make_inputs(k_c, (2, 3, 4, 128))
    out = jax.block_until_ready(bce_masked_loss(inp, target, mask, tile_rows=16))
    ref = _reference(inp, target, mask)
    assert jnp.allclose(out, ref, rtol=1e-5, atol=1e-5), (out, ref)

    print("KERNEL_OK")
</pallas_src>

<mosaic_0001>
module attributes {stable_mosaic.version = 11 : i64} {
  func.func @kernel(%arg0: i32, %arg1: i32, %arg2: memref<16x128xf32, #tpu.memory_space<vmem>>, %arg3: memref<16x128xf32, #tpu.memory_space<vmem>>, %arg4: memref<16x128xf32, #tpu.memory_space<vmem>>, %arg5: memref<8x128xf32, #tpu.memory_space<vmem>>, %arg6: memref<8x128xf32, #tpu.memory_space<vmem>>, %arg7: memref<16x128xf32, #tpu.memory_space<vmem>>, %arg8: memref<16x128xf32, #tpu.memory_space<vmem>>) attributes {dimension_semantics = [#tpu.dimension_semantics<parallel>, #tpu.dimension_semantics<arbitrary>], iteration_bounds = array<i64: 1, 1>, scalar_prefetch = 0 : i64, scratch_operands = 2 : i64, tpu.core_type = #tpu.core_type<tc>, window_params = [{transform_indices = @transform_0, window_bounds = array<i64: 16, 128>}, {transform_indices = @transform_1, window_bounds = array<i64: 16, 128>}, {transform_indices = @transform_2, window_bounds = array<i64: 16, 128>}, {transform_indices = @transform_3, window_bounds = array<i64: 8, 128>}, {transform_indices = @transform_4, window_bounds = array<i64: 8, 128>}]} {
    %c0_i32 = arith.constant 0 : i32
    %0 = arith.cmpi eq, %arg1, %c0_i32 : i32
    %1 = arith.extui %0 : i1 to i32
    %c0_i32_0 = arith.constant 0 : i32
    %2 = arith.cmpi ne, %1, %c0_i32_0 : i32
    scf.if %2 {
      %cst_23 = arith.constant 0.000000e+00 : f32
      %44 = vector.broadcast %cst_23 : f32 to vector<16x128xf32>
      %c0_24 = arith.constant 0 : index
      %c0_25 = arith.constant 0 : index
      %45 = vector.load %arg7[%c0_24, %c0_25] : memref<16x128xf32, #tpu.memory_space<vmem>>, vector<16x128xf32>
      tpu.vector_store %arg7[%c0_24, %c0_25], %44 {strides = array<i32>} : memref<16x128xf32, #tpu.memory_space<vmem>>, vector<16x128xf32>,
      %cst_26 = arith.constant 0.000000e+00 : f32
      %46 = vector.broadcast %cst_26 : f32 to vector<16x128xf32>
      %c0_27 = arith.constant 0 : index
      %c0_28 = arith.constant 0 : index
      %47 = vector.load %arg8[%c0_27, %c0_28] : memref<16x128xf32, #tpu.memory_space<vmem>>, vector<16x128xf32>
      tpu.vector_store %arg8[%c0_27, %c0_28], %46 {strides = array<i32>} : memref<16x128xf32, #tpu.memory_space<vmem>>, vector<16x128xf32>,
    } else {
    }
    %c0 = arith.constant 0 : index
    %c0_1 = arith.constant 0 : index
    %3 = vector.load %arg2[%c0, %c0_1] : memref<16x128xf32, #tpu.memory_space<vmem>>, vector<16x128xf32>
    %c0_2 = arith.constant 0 : index
    %c0_3 = arith.constant 0 : index
    %4 = vector.load %arg3[%c0_2, %c0_3] : memref<16x128xf32, #tpu.memory_space<vmem>>, vector<16x128xf32>
    %c0_4 = arith.constant 0 : index
    %c0_5 = arith.constant 0 : index
    %5 = vector.load %arg4[%c0_4, %c0_5] : memref<16x128xf32, #tpu.memory_space<vmem>>, vector<16x128xf32>
    %c1_i32 = arith.constant 1 : i32
    %6 = arith.muli %arg0, %c1_i32 : i32
    %7 = arith.addi %6, %arg1 : i32
    %c16_i32 = arith.constant 16 : i32
    %8 = arith.muli %7, %c16_i32 : i32
    %9 = tpu.iota {dimensions = array<i32: 0>} : vector<16x128xi32>
    %10 = vector.broadcast %8 : i32 to vector<16x128xi32>
    %11 = arith.addi %9, %10 : vector<16x128xi32>
    %c16_i32_6 = arith.constant 16 : i32
    %12 = vector.broadcast %c16_i32_6 : i32 to vector<16x128xi32>
    %13 = arith.cmpi slt, %11, %12 : vector<16x128xi32>
    %14 = arith.mulf %3, %5 : vector<16x128xf32>
    %15 = arith.mulf %4, %5 : vector<16x128xf32>
    %16 = math.log %14 : vector<16x128xf32>
    %cst = arith.constant -1.000000e+02 : f32
    %17 = vector.broadcast %cst : f32 to vector<16x128xf32>
    %18 = arith.maximumf %16, %17 : vector<16x128xf32>
    %cst_7 = arith.constant 1.000000e+00 : f32
    %19 = vector.broadcast %cst_7 : f32 to vector<16x128xf32>
    %20 = arith.subf %19, %14 : vector<16x128xf32>
    %21 = math.log %20 : vector<16x128xf32>
    %cst_8 = arith.constant -1.000000e+02 : f32
    %22 = vector.broadcast %cst_8 : f32 to vector<16x128xf32>
    %23 = arith.maximumf %21, %22 : vector<16x128xf32>
    %24 = arith.mulf %15, %18 : vector<16x128xf32>
    %cst_9 = arith.constant 1.000000e+00 : f32
    %25 = vector.broadcast %cst_9 : f32 to vector<16x128xf32>
    %26 = arith.subf %25, %15 : vector<16x128xf32>
    %27 = arith.mulf %26, %23 : vector<16x128xf32>
    %28 = arith.addf %24, %27 : vector<16x128xf32>
    %cst_10 = arith.constant 0.000000e+00 : f32
    %29 = vector.broadcast %cst_10 : f32 to vector<16x128xf32>
    %30 = arith.subf %29, %28 : vector<16x128xf32>
    %c0_11 = arith.constant 0 : index
    %c0_12 = arith.constant 0 : index
    %31 = vector.load %arg7[%c0_11, %c0_12] : memref<16x128xf32, #tpu.memory_space<vmem>>, vector<16x128xf32>
    %cst_13 = arith.constant 0.000000e+00 : f32
    %32 = vector.broadcast %cst_13 : f32 to vector<16x128xf32>
    %33 = arith.select %13, %30, %32 : vector<16x128xi1>, vector<16x128xf32>
    %34 = arith.addf %31, %33 : vector<16x128xf32>
    %c0_14 = arith.constant 0 : index
    %c0_15 = arith.constant 0 : index
    %35 = vector.load %arg7[%c0_14, %c0_15] : memref<16x128xf32, #tpu.memory_space<vmem>>, vector<16x128xf32>
    tpu.vector_store %arg7[%c0_14, %c0_15], %34 {strides = array<i32>} : memref<16x128xf32, #tpu.memory_space<vmem>>, vector<16x128xf32>,
    %c0_16 = arith.constant 0 : index
    %c0_17 = arith.constant 0 : index
    %36 = vector.load %arg8[%c0_16, %c0_17] : memref<16x128xf32, #tpu.memory_space<vmem>>, vector<16x128xf32>
    %cst_18 = arith.constant 0.000000e+00 : f32
    %37 = vector.broadcast %cst_18 : f32 to vector<16x128xf32>
    %38 = arith.select %13, %5, %37 : vector<16x128xi1>, vector<16x128xf32>
    %39 = arith.addf %36, %38 : vector<16x128xf32>
    %c0_19 = arith.constant 0 : index
    %c0_20 = arith.constant 0 : index
    %40 = vector.load %arg8[%c0_19, %c0_20] : memref<16x128xf32, #tpu.memory_space<vmem>>, vector<16x128xf32>
    tpu.vector_store %arg8[%c0_19, %c0_20], %39 {strides = array<i32>} : memref<16x128xf32, #tpu.memory_space<vmem>>, vector<16x128xf32>,
    %c0_i32_21 = arith.constant 0 : i32
    %41 = arith.cmpi eq, %arg1, %c0_i32_21 : i32
    %42 = arith.extui %41 : i1 to i32
    %c0_i32_22 = arith.constant 0 : i32
    %43 = arith.cmpi ne, %42, %c0_i32_22 : i32
    scf.if %43 {
      %c0_23 = arith.constant 0 : index
      %c0_24 = arith.constant 0 : index
      %44 = vector.load %arg7[%c0_23, %c0_24] : memref<16x128xf32, #tpu.memory_space<vmem>>, vector<16x128xf32>
      %45 = vector.shape_cast %44 : vector<16x128xf32> to vector<1x16x128xf32>
      %cst_25 = arith.constant dense<0.000000e+00> : vector<1xf32>
      %46 = vector.multi_reduction <add>, %45, %cst_25 [1, 2] : vector<1x16x128xf32> to vector<1xf32>
      %47 = vector.shape_cast %46 : vector<1xf32> to vector<1x1x1xf32>
      %48 = vector.extract %47[0, 0, 0] : f32 from vector<1x1x1xf32>
      %49 = vector.broadcast %48 : f32 to vector<8x128xf32>
      %c0_26 = arith.constant 0 : index
      %c0_27 = arith.constant 0 : index
      %50 = vector.load %arg5[%c0_26, %c0_27] : memref<8x128xf32, #tpu.memory_space<vmem>>, vector<8x128xf32>
      tpu.vector_store %arg5[%c0_26, %c0_27], %49 {strides = array<i32>} : memref<8x128xf32, #tpu.memory_space<vmem>>, vector<8x128xf32>,
      %c0_28 = arith.constant 0 : index
      %c0_29 = arith.constant 0 : index
      %51 = vector.load %arg8[%c0_28, %c0_29] : memref<16x128xf32, #tpu.memory_space<vmem>>, vector<16x128xf32>
      %52 = vector.shape_cast %51 : vector<16x128xf32> to vector<1x16x128xf32>
      %cst_30 = arith.constant dense<0.000000e+00> : vector<1xf32>
      %53 = vector.multi_reduction <add>, %52, %cst_30 [1, 2] : vector<1x16x128xf32> to vector<1xf32>
      %54 = vector.shape_cast %53 : vector<1xf32> to vector<1x1x1xf32>
      %55 = vector.extract %54[0, 0, 0] : f32 from vector<1x1x1xf32>
      %56 = vector.broadcast %55 : f32 to vector<8x128xf32>
      %c0_31 = arith.constant 0 : index
      %c0_32 = arith.constant 0 : index
      %57 = vector.load %arg6[%c0_31, %c0_32] : memref<8x128xf32, #tpu.memory_space<vmem>>, vector<8x128xf32>
      tpu.vector_store %arg6[%c0_31, %c0_32], %56 {strides = array<i32>} : memref<8x128xf32, #tpu.memory_space<vmem>>, vector<8x128xf32>,
    } else {
    }
    return
  }
  func.func @transform_0(%arg0: i32, %arg1: i32) -> (i32, i32) {
    %c1_i32 = arith.constant 1 : i32
    %0 = arith.muli %arg0, %c1_i32 : i32
    %1 = arith.addi %0, %arg1 : i32
    %c0_i32 = arith.constant 0 : i32
    %2 = arith.minsi %1, %c0_i32 : i32
    %c0_i32_0 = arith.constant 0 : i32
    %c0_i32_1 = arith.constant 0 : i32
    return %2, %c0_i32_0 : i32, i32
  }
  func.func @transform_1(%arg0: i32, %arg1: i32) -> (i32, i32) {
    %c1_i32 = arith.constant 1 : i32
    %0 = arith.muli %arg0, %c1_i32 : i32
    %1 = arith.addi %0, %arg1 : i32
    %c0_i32 = arith.constant 0 : i32
    %2 = arith.minsi %1, %c0_i32 : i32
    %c0_i32_0 = arith.constant 0 : i32
    %c0_i32_1 = arith.constant 0 : i32
    return %2, %c0_i32_0 : i32, i32
  }
  func.func @transform_2(%arg0: i32, %arg1: i32) -> (i32, i32) {
    %c1_i32 = arith.constant 1 : i32
    %0 = arith.muli %arg0, %c1_i32 : i32
    %1 = arith.addi %0, %arg1 : i32
    %c0_i32 = arith.constant 0 : i32
    %2 = arith.minsi %1, %c0_i32 : i32
    %c0_i32_0 = arith.constant 0 : i32
    %c0_i32_1 = arith.constant 0 : i32
    return %2, %c0_i32_0 : i32, i32
  }
  func.func @transform_3(%arg0: i32, %arg1: i32) -> (i32, i32) {
    %c0_i32 = arith.constant 0 : i32
    %c0_i32_0 = arith.constant 0 : i32
    return %arg0, %c0_i32 : i32, i32
  }
  func.func @transform_4(%arg0: i32, %arg1: i32) -> (i32, i32) {
    %c0_i32 = arith.constant 0 : i32
    %c0_i32_0 = arith.constant 0 : i32
    return %arg0, %c0_i32 : i32, i32
  }
}

</mosaic_0001>

<llo_original>
// kernel: tpu_custom_call.1
$region0: #{tpu_custom_call.1}
  #allocation0 [shape = 'u32[]', space=smem, size = 0x4, offset = 0x4, fixed_abs, tag = 'smem constant byte address 0x4 - core index']
  #allocation1 [shape = 'u32[144,128]{1,0:T(1,128)}', space=vmem, size = 0x12000, scoped, tag = 'internal scratch']
  #allocation2 [shape = 'f32[16,128]{1,0:T(8,128)}', space=vmem, size = 0x2000, scoped, tag = 'scratch operand']
  #allocation3 [shape = 'f32[16,128]{1,0:T(8,128)}', space=vmem, size = 0x2000, scoped, tag = 'scratch operand']
  %s0 = inlined_call_operand.hbm [shape: f32[16,128], index: 0, kind: input, shape index: {}]
  %s1 = inlined_call_operand.hbm [shape: f32[16,128], index: 1, kind: input, shape index: {}]
  %s2 = inlined_call_operand.hbm [shape: f32[16,128], index: 2, kind: input, shape index: {}]
  %s3 = inlined_call_operand.hbm [shape: f32[8,128], index: 3, kind: output, shape index: {0}]
  %s4 = inlined_call_operand.hbm [shape: f32[8,128], index: 4, kind: output, shape index: {1}]
  %5 = xla_tuple %s3, %s4
  %s6 = sld [smem:[#allocation0]]
  $region50: #{tpu_custom_call.1} parent=0
    _
  %s8 = ssub.s32 1, %s6
  %s9 = scalar_select 0, %s8, %s6
  $region1: #{tpu_custom_call.1} parent=0
    #allocation4 [shape = 'u8[8192]{0}', space=vmem, size = 0x2000, scoped, tag = 'input window, operand 0, single buffered']
    #allocation5 [shape = 's32[1]{0}', space=sflag, size = 0x4, scoped, tag = 'scoped memory for tpu_custom_call.1']
    #allocation6 [shape = 's32[1]{0}', space=sflag, size = 0x4, scoped, tag = 'scoped memory for tpu_custom_call.1']
    #allocation7 [shape = 'u8[8192]{0}', space=vmem, size = 0x2000, scoped, tag = 'input window, operand 1, single buffered']
    #allocation8 [shape = 's32[1]{0}', space=sflag, size = 0x4, scoped, tag = 'scoped memory for tpu_custom_call.1']
    #allocation9 [shape = 'u8[8192]{0}', space=vmem, size = 0x2000, scoped, tag = 'input window, operand 2, single buffered']
    #allocation10 [shape = 'u8[4096]{0}', space=vmem, size = 0x1000, scoped, tag = 'output window, operand 0, single buffered']
    #allocation11 [shape = 'u8[4096]{0}', space=vmem, size = 0x1000, scoped, tag = 'output window, operand 1, single buffered']
    #allocation12 [shape = 's32[1]{0}', space=sflag, size = 0x4, scoped, tag = 'scoped memory for tpu_custom_call.1']
    %10 = vsyncpa [#allocation5], 0
    %11 = vsyncpa [#allocation8], 0
    %12 = vsyncpa [#allocation6], 0
    %13 = vsyncpa [#allocation12], 0
    // Predicated region
    $region2: #{tpu_custom_call.1} parent=1 // pred_check
      _
    $region3: #{tpu_custom_call.1} parent=1 // pred_check_branch
      %15 = sbr.rel (0) target = $region5
    $region4: #{tpu_custom_call.1} parent=1 // pred_region
      %s16 = sadd.s32 0, 0
      %p17 = scmp.lt.s32.totalorder %s16, 0
      %s18 = scalar_select %p17, %s16, 0
      %s19 = smul.u32 2, %s18
      %s21 = ssub.s32 256, 256
      %22 = vsyncadd [#allocation5], %s21
      %s23 = smul.addr %s19, 128
      %s24 = scalar_lea.hbm %s0, %s23
      %s25 = sshll.u32 [#allocation4], 4
      %s26 = int_to_ptr.vmem [resolvable:$true] %s25
      %31 = dma.hbm_to_vmem [thread:$0]  %s24, 256, %s26, [#allocation5], 128, 128, 8
    $region5: #{tpu_custom_call.1} parent=1 // pred_fallthru
      _
    // Predicated region
    $region6: #{tpu_custom_call.1} parent=1 // pred_check
      _
    $region7: #{tpu_custom_call.1} parent=1 // pred_check_branch
      %33 = sbr.rel (0) target = $region9
    $region8: #{tpu_custom_call.1} parent=1 // pred_region
      %s34 = sadd.s32 0, 0
      %p35 = scmp.lt.s32.totalorder %s34, 0
      %s36 = scalar_select %p35, %s34, 0
      %s37 = smul.u32 2, %s36
      %s39 = ssub.s32 256, 256
      %40 = vsyncadd [#allocation8], %s39
      %s41 = smul.addr %s37, 128
      %s42 = scalar_lea.hbm %s1, %s41
      %s43 = sshll.u32 [#allocation7], 4
      %s44 = int_to_ptr.vmem [resolvable:$true] %s43
      %49 = dma.hbm_to_vmem [thread:$0]  %s42, 256, %s44, [#allocation8], 128, 128, 8
    $region9: #{tpu_custom_call.1} parent=1 // pred_fallthru
      _
    // Predicated region
    $region10: #{tpu_custom_call.1} parent=1 // pred_check
      _
    $region11: #{tpu_custom_call.1} parent=1 // pred_check_branch
      %51 = sbr.rel (0) target = $region13
    $region12: #{tpu_custom_call.1} parent=1 // pred_region
      %s52 = sadd.s32 0, 0
      %p53 = scmp.lt.s32.totalorder %s52, 0
      %s54 = scalar_select %p53, %s52, 0
      %s55 = smul.u32 2, %s54
      %s57 = ssub.s32 256, 256
      %58 = vsyncadd [#allocation8], %s57
      %s59 = smul.addr %s55, 128
      %s60 = scalar_lea.hbm %s2, %s59
      %s61 = sshll.u32 [#allocation9], 4
      %s62 = int_to_ptr.vmem [resolvable:$true] %s61
      %67 = dma.hbm_to_vmem [thread:$0]  %s60, 256, %s62, [#allocation8], 128, 128, 8
    $region13: #{tpu_custom_call.1} parent=1 // pred_fallthru
      _
    // Predicated region
    $region14: #{tpu_custom_call.1} parent=1 // pred_check
      _
    $region15: #{tpu_custom_call.1} parent=1 // pred_check_branch
      %69 = sbr.rel (0) target = $region17
    $region16: #{tpu_custom_call.1} parent=1 // pred_region
      %70 = dma.done [#allocation5], 256
    $region17: #{tpu_custom_call.1} parent=1 // pred_fallthru
      _
    // Predicated region
    $region18: #{tpu_custom_call.1} parent=1 // pred_check
      _
    $region19: #{tpu_custom_call.1} parent=1 // pred_check_branch
      %72 = sbr.rel (0) target = $region21
    $region20: #{tpu_custom_call.1} parent=1 // pred_region
      %73 = dma.done [#allocation8], 256
    $region21: #{tpu_custom_call.1} parent=1 // pred_fallthru
      _
    // Predicated region
    $region22: #{tpu_custom_call.1} parent=1 // pred_check
      _
    $region23: #{tpu_custom_call.1} parent=1 // pred_check_branch
      %75 = sbr.rel (0) target = $region25
    $region24: #{tpu_custom_call.1} parent=1 // pred_region
      %76 = dma.done [#allocation8], 256
    $region25: #{tpu_custom_call.1} parent=1 // pred_fallthru
      _
    %s77 = sadd.s32 0, 0
    %p78 = scmp.lt.s32.totalorder %s77, 0
    %s79 = scalar_select %p78, %s77, 0
    %s80 = smul.u32 2, %s79
    %s81 = sadd.s32 0, 0
    %p82 = scmp.lt.s32.totalorder %s81, 0
    %s83 = scalar_select %p82, %s81, 0
    %s84 = smul.u32 2, %s83
    %s85 = sadd.s32 0, 0
    %p86 = scmp.lt.s32.totalorder %s85, 0
    %s87 = scalar_select %p86, %s85, 0
    %s88 = smul.u32 2, %s87
    %p89 = scmp.eq.s32.totalorder 0, 0
    // Predicated region
    $region26: #{tpu_custom_call.1} parent=1 // pred_check
      %p90 = pneg %p89
    $region27: #{tpu_custom_call.1} parent=1 // pred_check_branch
      %92 = sbr.rel (%p90) target = $region29
    $region28: #{tpu_custom_call.1} parent=1 // pred_region
      %93 = vst [vmem:[#allocation2] sm:$0xff] 0.0
      %94 = vst [vmem:[#allocation2 + $0x8] sm:$0xff] 0.0
      %95 = vst [vmem:[#allocation3] sm:$0xff] 0.0
      %96 = vst [vmem:[#allocation3 + $0x8] sm:$0xff] 0.0
    $region29: #{tpu_custom_call.1} parent=1 // pred_fallthru
      _
    %v97 = vld [vmem:[#allocation4] sm:$0xff]
    %v98 = vld [vmem:[#allocation4 + $0x8] sm:$0xff]
    %v99 = vld [vmem:[#allocation7] sm:$0xff]
    %v100 = vld [vmem:[#allocation7 + $0x8] sm:$0xff]
    %v101 = vld [vmem:[#allocation9] sm:$0xff]
    %v102 = vld [vmem:[#allocation9 + $0x8] sm:$0xff]
    %s103 = sadd.s32 0, 0
    %s104 = smul.u32 %s103, 16
    %v105 = vlaneseq
    %v106 = vshrl.u32 %v105, 7
    %v107 = vadd.s32 %v106, 8
    %v108 = vstv %s104
    %v109 = vadd.s32 %v106, %v108
    %v110 = vadd.s32 %v107, %v108
    %vm111 = vcmp.lt.s32.totalorder %v109, 16
    %vm112 = vcmp.lt.s32.totalorder %v110, 16
    %v113 = vmul.f32 %v97, %v101
    %v114 = vmul.f32 %v98, %v102
    %v115 = vmul.f32 %v99, %v101
    %v116 = vmul.f32 %v100, %v102
    %v117 = vlog2.pop %v113
    %v118 = vmul.f32 %v117, 0.6931472
    %v119 = vlog2.pop %v114
    %v120 = vmul.f32 %v119, 0.6931472
    %v121 = vmax.f32 %v118, -100.0
    %v122 = vmax.f32 %v120, -100.0
    %v123 = vsub.f32 1.0, %v113
    %v124 = vsub.f32 1.0, %v114
    %v125 = vlog2.pop %v123
    %v126 = vmul.f32 %v125, 0.6931472
    %v127 = vlog2.pop %v124
    %v128 = vmul.f32 %v127, 0.6931472
    %v129 = vmax.f32 %v126, -100.0
    %v130 = vmax.f32 %v128, -100.0
    %v131 = vmul.f32 %v115, %v121
    %v132 = vmul.f32 %v116, %v122
    %v133 = vsub.f32 1.0, %v115
    %v134 = vsub.f32 1.0, %v116
    %v135 = vmul.f32 %v133, %v129
    %v136 = vmul.f32 %v134, %v130
    %v137 = vadd.f32 %v131, %v135
    %v138 = vadd.f32 %v132, %v136
    %v139 = vsub.f32 0.0, %v137
    %v140 = vsub.f32 0.0, %v138
    %v141 = vld [vmem:[#allocation2] sm:$0xff]
    %v142 = vld [vmem:[#allocation2 + $0x8] sm:$0xff]
    %v143 = vsel %vm111, %v139, 0.0
    %v144 = vsel %vm112, %v140, 0.0
    %v145 = vadd.f32 %v141, %v143
    %v146 = vadd.f32 %v142, %v144
    %147 = vst [vmem:[#allocation2] sm:$0xff] %v145
    %148 = vst [vmem:[#allocation2 + $0x8] sm:$0xff] %v146
    %v149 = vld [vmem:[#allocation3] sm:$0xff]
    %v150 = vld [vmem:[#allocation3 + $0x8] sm:$0xff]
    %v151 = vsel %vm111, %v101, 0.0
    %v152 = vsel %vm112, %v102, 0.0
    %v153 = vadd.f32 %v149, %v151
    %v154 = vadd.f32 %v150, %v152
    %155 = vst [vmem:[#allocation3] sm:$0xff] %v153
    %156 = vst [vmem:[#allocation3 + $0x8] sm:$0xff] %v154
    // Predicated region
    $region30: #{tpu_custom_call.1} parent=1 // pred_check
      %p157 = pneg %p89
    $region31: #{tpu_custom_call.1} parent=1 // pred_check_branch
      %159 = sbr.rel (%p157) target = $region33
    $region32: #{tpu_custom_call.1} parent=1 // pred_region
      %v160 = vld [vmem:[#allocation2] sm:$0xff]
      %v161 = vld [vmem:[#allocation2 + $0x8] sm:$0xff]
      %v162 = vadd.f32 %v160, %v161
      %163 = vadd.xlane.f32.xlu0 %v162
      %v164 = vpop.xlane.xlu0 %163
      %v165 = vrot.slane %v164, 4
      %v166 = vadd.f32 %v164, %v165
      %v167 = vrot.slane %v166, 2
      %v168 = vadd.f32 %v166, %v167
      %v169 = vrot.slane %v168, 1
      %v170 = vadd.f32 %v168, %v169
      %s171 = vtos %v170
      %v172 = vstv %s171
      %173 = vst [vmem:[#allocation10] sm:$0xff] %v172
      %v174 = vld [vmem:[#allocation3] sm:$0xff]
      %v175 = vld [vmem:[#allocation3 + $0x8] sm:$0xff]
      %v176 = vadd.f32 %v174, %v175
      %177 = vadd.xlane.f32.xlu0 %v176
      %v178 = vpop.xlane.xlu0 %177
      %v179 = vrot.slane %v178, 4
      %v180 = vadd.f32 %v178, %v179
      %v181 = vrot.slane %v180, 2
      %v182 = vadd.f32 %v180, %v181
      %v183 = vrot.slane %v182, 1
      %v184 = vadd.f32 %v182, %v183
      %s185 = vtos %v184
      %v186 = vstv %s185
      %187 = vst [vmem:[#allocation11] sm:$0xff] %v186
    $region33: #{tpu_custom_call.1} parent=1 // pred_fallthru
      _
    // Predicated region
    $region34: #{tpu_custom_call.1} parent=1 // pred_check
      _
    $region35: #{tpu_custom_call.1} parent=1 // pred_check_branch
      %189 = sbr.rel (0) target = $region37
    $region36: #{tpu_custom_call.1} parent=1 // pred_region
      %s191 = ssub.s32 128, 128
      %192 = vsyncadd [#allocation6], %s191
      %s194 = sshll.u32 [#allocation10], 4
      %s195 = int_to_ptr.vmem [resolvable:$true] %s194
      %197 = dma.vmem_to_hbm [thread:$0]  %s195, 128, %s3, [#allocation6]
    $region37: #{tpu_custom_call.1} parent=1 // pred_fallthru
      _
    // Predicated region
    $region38: #{tpu_custom_call.1} parent=1 // pred_check
      _
    $region39: #{tpu_custom_call.1} parent=1 // pred_check_branch
      %199 = sbr.rel (0) target = $region41
    $region40: #{tpu_custom_call.1} parent=1 // pred_region
      %s201 = ssub.s32 128, 128
      %202 = vsyncadd [#allocation12], %s201
      %s204 = sshll.u32 [#allocation11], 4
      %s205 = int_to_ptr.vmem [resolvable:$true] %s204
      %207 = dma.vmem_to_hbm [thread:$0]  %s205, 128, %s4, [#allocation12]
    $region41: #{tpu_custom_call.1} parent=1 // pred_fallthru
      _
    // Predicated region
    $region42: #{tpu_custom_call.1} parent=1 // pred_check
      _
    $region43: #{tpu_custom_call.1} parent=1 // pred_check_branch
      %209 = sbr.rel (0) target = $region45
    $region44: #{tpu_custom_call.1} parent=1 // pred_region
      %210 = dma.done [#allocation6], 128
    $region45: #{tpu_custom_call.1} parent=1 // pred_fallthru
      _
    // Predicated region
    $region46: #{tpu_custom_call.1} parent=1 // pred_check
      _
    $region47: #{tpu_custom_call.1} parent=1 // pred_check_branch
      %212 = sbr.rel (0) target = $region49
    $region48: #{tpu_custom_call.1} parent=1 // pred_region
      %213 = dma.done [#allocation12], 128
    $region49: #{tpu_custom_call.1} parent=1 // pred_fallthru
      _
    %214 = vsyncpa [#allocation5], 1
    %215 = vsyncpa [#allocation8], 1
    %216 = vsyncpa [#allocation6], 1
    %217 = vsyncpa [#allocation12], 1

</llo_original>
